<compile_context>
chip_gen: v7x
topology: tpu7x:2x2x1
jax: 0.10.0
libtpu: 0.0.40
codegen_flags: <defaults>
</compile_context>

<pallas_src>
import math

import jax
import jax.numpy as jnp
from jax.experimental import pallas as pl
from jax.experimental.pallas import tpu as pltpu

NUM_HEADS = 8
LN_EPS = 1e-5


# ----------------------------------------------------------------------------
# small math helpers (run in f32 inside kernels)
# ----------------------------------------------------------------------------
def _erf(x):
    # Abramowitz & Stegun 7.1.26 (max abs err 1.5e-7 => fp32-accurate GELU).
    # Exact divide kept here (not approx reciprocal) to stay within fp32 noise
    # of torch's erf-based F.gelu; the FF matmul hides it as VALU filler.
    a1, a2, a3, a4, a5 = 0.254829592, -0.284496736, 1.421413741, -1.453152027, 1.061405429
    p = 0.3275911
    ax = jnp.abs(x)
    t = 1.0 / (1.0 + p * ax)
    poly = ((((a5 * t + a4) * t + a3) * t + a2) * t + a1) * t
    y = 1.0 - poly * jnp.exp(-ax * ax)
    return jnp.where(x >= 0.0, y, -y)


def _gelu_exact(x):
    # Matches torch F.gelu default (erf-based).
    return 0.5 * x * (1.0 + _erf(x * (1.0 / math.sqrt(2.0))))


def _layernorm(x, w, b):
    # torch.nn.LayerNorm over last dim, biased variance, eps=1e-5.
    mu = jnp.mean(x, axis=-1, keepdims=True)
    xc = x - mu
    var = jnp.mean(xc * xc, axis=-1, keepdims=True)
    return xc * jax.lax.rsqrt(var + LN_EPS) * w + b


# ----------------------------------------------------------------------------
# Kernel 1: fc6 (Linear) + ReLU, tiled / pipelined matmul
# ----------------------------------------------------------------------------
def _fc6_relu_kernel(x_ref, w_ref, b_ref, o_ref, acc_ref):
    k = pl.program_id(1)

    @pl.when(k == 0)
    def _():
        acc_ref[...] = jnp.zeros_like(acc_ref)

    # bf16 operands, f32 accumulation on the MXU.
    acc_ref[...] += jnp.dot(x_ref[...], w_ref[...],
                            preferred_element_type=jnp.float32)

    @pl.when(k == pl.num_programs(1) - 1)
    def _():
        o_ref[...] = jnp.maximum(acc_ref[...] + b_ref[...], 0.0)


def _pick_tile_k(k_dim):
    # Prefer a K tile that splits the reduction (so the accumulate/pipeline
    # path is exercised) while keeping the double-buffered (tk, rep) bf16
    # weight tile small enough for v7x's 64 MiB VMEM.
    for cand in (2048, 1024, 512, 256, 128):
        if k_dim % cand == 0 and k_dim // cand >= 2:
            return cand
    for cand in (2048, 1024, 512, 256, 128):
        if k_dim % cand == 0:
            return cand
    return k_dim


def _fc6_relu(x_flat_bf16, w_bf16, b_f32):
    n, k_dim = x_flat_bf16.shape
    rep = w_bf16.shape[1]

    tm = n if n <= 128 else 128
    n_pad = pl.cdiv(n, tm) * tm
    if n_pad != n:
        x_flat_bf16 = jnp.pad(x_flat_bf16, ((0, n_pad - n), (0, 0)))
    tk = _pick_tile_k(k_dim)

    # 2x buffers for the pipelined inputs/outputs + the f32 accumulator.
    est = 2 * (tm * tk * 2 + tk * rep * 2 + 8 * max(rep, 128) * 4
               + tm * max(rep, 128) * 4) + tm * max(rep, 128) * 4
    vmem_bytes = max(16 << 20, min(int(est * 2) + (2 << 20), 64 << 20))

    out = pl.pallas_call(
        _fc6_relu_kernel,
        out_shape=jax.ShapeDtypeStruct((n_pad, rep), jnp.float32),
        grid_spec=pltpu.PrefetchScalarGridSpec(
            num_scalar_prefetch=0,
            grid=(n_pad // tm, k_dim // tk),
            in_specs=[
                pl.BlockSpec((tm, tk), lambda i, k: (i, k)),     # x rows
                pl.BlockSpec((tk, rep), lambda i, k: (k, 0)),    # streamed W
                pl.BlockSpec((1, rep), lambda i, k: (0, 0)),     # bias
            ],
            out_specs=pl.BlockSpec((tm, rep), lambda i, k: (i, 0)),
            scratch_shapes=[pltpu.VMEM((tm, rep), jnp.float32)],
        ),
        compiler_params=pltpu.CompilerParams(
            dimension_semantics=("parallel", "arbitrary"),
            vmem_limit_bytes=vmem_bytes,
        ),
    )(x_flat_bf16, w_bf16, b_f32)
    return out[:n]


# ----------------------------------------------------------------------------
# Kernel 2: 1-layer TransformerEncoder (post-norm, nhead=8, GELU, eval mode)
# ----------------------------------------------------------------------------
def _encoder_kernel(h_ref, wqkv_ref, bqkv_ref, wo_ref, bo_ref,
                    ln1_w_ref, ln1_b_ref, w1_ref, b1_ref, w2_ref, b2_ref,
                    ln2_w_ref, ln2_b_ref, out_ref):
    f32 = jnp.float32
    bf16 = jnp.bfloat16

    h = h_ref[...]                                   # (N, R) f32
    n, r = h.shape
    hd = r // NUM_HEADS
    scale = 1.0 / math.sqrt(hd)

    # Fused in-projection: one (N,R)@(R,3R) MXU op instead of three.
    qkv = jnp.dot(h.astype(bf16), wqkv_ref[...],
                  preferred_element_type=f32) + bqkv_ref[...]
    q = qkv[:, :r] * scale
    k = qkv[:, r:2 * r]
    v = qkv[:, 2 * r:]

    # Multi-head self-attention over the batch dimension (seq len == N).
    # Dropout inside MHA is identity in eval mode.
    heads = []
    for hh in range(NUM_HEADS):
        sl = slice(hh * hd, (hh + 1) * hd)
        s = jax.lax.dot_general(q[:, sl], k[:, sl], (((1,), (1,)), ((), ())),
                                preferred_element_type=f32)       # (N, N)
        s = s - jnp.max(s, axis=-1, keepdims=True)
        p = jnp.exp(s)
        p = p * pl.reciprocal(jnp.sum(p, axis=-1, keepdims=True), approx=True)
        heads.append(jnp.dot(p, v[:, sl], preferred_element_type=f32))
    concat = jnp.concatenate(heads, axis=-1)                      # (N, R)

    # Single full-K output projection (replaces 8 tiny-K matmuls over Wo).
    attn = jnp.dot(concat.astype(bf16), wo_ref[...],
                   preferred_element_type=f32) + bo_ref[...]

    # residual + LayerNorm 1 (norm_first=False)
    y = _layernorm(h + attn, ln1_w_ref[...], ln1_b_ref[...])

    # feed-forward: linear1 -> exact GELU -> linear2 (dropout = identity)
    f = jnp.dot(y.astype(bf16), w1_ref[...], preferred_element_type=f32) + b1_ref[...]
    f = _gelu_exact(f)
    f = jnp.dot(f.astype(bf16), w2_ref[...], preferred_element_type=f32) + b2_ref[...]

    # residual + LayerNorm 2
    out_ref[...] = _layernorm(y + f, ln2_w_ref[...], ln2_b_ref[...])


def _encoder_layer(h, params):
    n, rep = h.shape
    args = (
        h,
        params["wqkv"], params["bqkv"],
        params["wo"], params["bo"],
        params["ln1_w"], params["ln1_b"],
        params["w1"], params["b1"],
        params["w2"], params["b2"],
        params["ln2_w"], params["ln2_b"],
    )
    total_bytes = sum(int(a.size) * a.dtype.itemsize for a in args)
    vmem_bytes = max(16 << 20, min(int(total_bytes * 3) + (8 << 20), 64 << 20))
    vmem_spec = pl.BlockSpec(memory_space=pltpu.MemorySpace.VMEM)
    # NOTE: the encoder must see the full (N, rep) activation since attention
    # mixes rows (sequence == batch).  Its weights are small (~12 MiB bf16 at
    # rep=1024), so a grid-less VMEM-resident kernel is appropriate here.
    return pl.pallas_call(
        _encoder_kernel,
        out_shape=jax.ShapeDtypeStruct((n, rep), jnp.float32),
        in_specs=[vmem_spec] * len(args),
        out_specs=vmem_spec,
        compiler_params=pltpu.CompilerParams(vmem_limit_bytes=vmem_bytes),
    )(*args)


# ----------------------------------------------------------------------------
# Public forward + params
# ----------------------------------------------------------------------------
def two_mlp_head_forward(x_nchw, params):
    """x_nchw: (N, C, H, W) -> (N, representation_size) float32 (eval mode)."""
    n = x_nchw.shape[0]
    x_flat = x_nchw.reshape(n, -1).astype(jnp.bfloat16)   # torch.flatten(start_dim=1)
    h = _fc6_relu(x_flat, params["fc6_w"], params["fc6_b"])
    return _encoder_layer(h, params)


def init_params(key, in_channels, rep):
    assert rep % NUM_HEADS == 0
    ks = iter(jax.random.split(key, 12))
    f32 = jnp.float32

    def w(shape, scale=0.02, dtype=jnp.bfloat16):
        return (scale * jax.random.normal(next(ks), shape, f32)).astype(dtype)

    return {
        # fc6: nn.Linear(in_channels, rep) — stored (in, out), bf16 weights
        "fc6_w": w((in_channels, rep)), "fc6_b": w((1, rep), dtype=f32),
        # MHA fused in_proj (q|k|v) and out_proj
        "wqkv": w((rep, 3 * rep)), "bqkv": w((1, 3 * rep), dtype=f32),
        "wo": w((rep, rep)), "bo": w((1, rep), dtype=f32),
        # LayerNorm 1
        "ln1_w": jnp.ones((1, rep), f32), "ln1_b": jnp.zeros((1, rep), f32),
        # feed-forward (dim_feedforward == rep in this module)
        "w1": w((rep, rep)), "b1": w((1, rep), dtype=f32),
        "w2": w((rep, rep)), "b2": w((1, rep), dtype=f32),
        # LayerNorm 2
        "ln2_w": jnp.ones((1, rep), f32), "ln2_b": jnp.zeros((1, rep), f32),
    }


def reference_forward(x_nchw, params):
    """Pure-JAX f32 reference (same bf16-stored weights) for a sanity check."""
    f32 = jnp.float32
    x = x_nchw.reshape(x_nchw.shape[0], -1).astype(f32)
    h = jnp.maximum(x @ params["fc6_w"].astype(f32) + params["fc6_b"], 0.0)
    r = h.shape[1]
    hd = r // NUM_HEADS
    qkv = h @ params["wqkv"].astype(f32) + params["bqkv"]
    q, k, v = qkv[:, :r], qkv[:, r:2 * r], qkv[:, 2 * r:]
    heads = []
    for hh in range(NUM_HEADS):
        sl = slice(hh * hd, (hh + 1) * hd)
        s = (q[:, sl] / math.sqrt(hd)) @ k[:, sl].T
        p = jax.nn.softmax(s, axis=-1)
        heads.append(p @ v[:, sl])
    attn = jnp.concatenate(heads, -1) @ params["wo"].astype(f32) + params["bo"]

    def ln(z, wt, bt):
        mu = z.mean(-1, keepdims=True)
        var = ((z - mu) ** 2).mean(-1, keepdims=True)
        return (z - mu) * jax.lax.rsqrt(var + LN_EPS) * wt + bt

    y = ln(h + attn, params["ln1_w"], params["ln1_b"])
    f = y @ params["w1"].astype(f32) + params["b1"]
    f = 0.5 * f * (1.0 + jax.lax.erf(f / math.sqrt(2.0)))
    f = f @ params["w2"].astype(f32) + params["b2"]
    return ln(y + f, params["ln2_w"], params["ln2_b"])


if __name__ == "__main__":
    key = jax.random.PRNGKey(0)
    k_x, k_p = jax.random.split(key)

    N, C, H, W = 2, 4, 16, 16          # in_channels = C*H*W = 1024
    REP = 32                           # representation_size (divisible by nhead=8)

    x = jax.random.normal(k_x, (N, C, H, W), dtype=jnp.float32)
    params = init_params(k_p, C * H * W, REP)

    out = jax.block_until_ready(two_mlp_head_forward(x, params))

    assert out.shape == (N, REP), out.shape
    assert out.dtype == jnp.float32
    assert bool(jnp.all(jnp.isfinite(out)))

    ref = jax.block_until_ready(reference_forward(x, params))
    max_err = float(jnp.max(jnp.abs(out - ref)))
    assert max_err < 0.1, f"max abs err vs f32 reference: {max_err}"

    print("KERNEL_OK")
</pallas_src>

<mosaic_0001>
module attributes {stable_mosaic.version = 11 : i64} {
  func.func @_fc6_relu_kernel(%arg0: i32, %arg1: i32, %arg2: memref<2x512xbf16, #tpu.memory_space<vmem>>, %arg3: memref<512x32xbf16, #tpu.memory_space<vmem>>, %arg4: memref<1x32xf32, #tpu.memory_space<vmem>>, %arg5: memref<2x32xf32, #tpu.memory_space<vmem>>, %arg6: memref<2x32xf32, #tpu.memory_space<vmem>>) attributes {dimension_semantics = [#tpu.dimension_semantics<parallel>, #tpu.dimension_semantics<arbitrary>], iteration_bounds = array<i64: 1, 2>, scalar_prefetch = 0 : i64, scratch_operands = 1 : i64, tpu.core_type = #tpu.core_type<tc>, window_params = [{transform_indices = @transform_0, window_bounds = array<i64: 2, 512>}, {transform_indices = @transform_1, window_bounds = array<i64: 512, 32>}, {pipeline_mode = #tpu.pipeline_mode<synchronous>, transform_indices = @transform_2, window_bounds = array<i64: 1, 32>}, {transform_indices = @transform_3, window_bounds = array<i64: 2, 32>}]} {
    %c0_i32 = arith.constant 0 : i32
    %0 = arith.cmpi eq, %arg1, %c0_i32 : i32
    %1 = arith.extui %0 : i1 to i32
    %c0_i32_0 = arith.constant 0 : i32
    %2 = arith.cmpi ne, %1, %c0_i32_0 : i32
    scf.if %2 {
      %cst_9 = arith.constant 0.000000e+00 : f32
      %12 = vector.broadcast %cst_9 : f32 to vector<2x32xf32>
      %c0_10 = arith.constant 0 : index
      %c0_11 = arith.constant 0 : index
      %13 = vector.load %arg6[%c0_10, %c0_11] : memref<2x32xf32, #tpu.memory_space<vmem>>, vector<2x32xf32>
      tpu.vector_store %arg6[%c0_10, %c0_11], %12 {strides = array<i32>} : memref<2x32xf32, #tpu.memory_space<vmem>>, vector<2x32xf32>,
    } else {
    }
    %c0 = arith.constant 0 : index
    %c0_1 = arith.constant 0 : index
    %3 = vector.load %arg6[%c0, %c0_1] : memref<2x32xf32, #tpu.memory_space<vmem>>, vector<2x32xf32>
    %c0_2 = arith.constant 0 : index
    %c0_3 = arith.constant 0 : index
    %4 = vector.load %arg2[%c0_2, %c0_3] : memref<2x512xbf16, #tpu.memory_space<vmem>>, vector<2x512xbf16>
    %c0_4 = arith.constant 0 : index
    %c0_5 = arith.constant 0 : index
    %5 = vector.load %arg3[%c0_4, %c0_5] : memref<512x32xbf16, #tpu.memory_space<vmem>>, vector<512x32xbf16>
    %cst = arith.constant dense<0.000000e+00> : vector<2x32xf32>
    %6 = tpu.matmul %4, %5, %cst {dimension_numbers = #tpu.dot_dimension_numbers<[1], [0], [0], [1], [0, 0, 1, 1], [], []>} : vector<2x512xbf16>, vector<512x32xbf16>, vector<2x32xf32> -> vector<2x32xf32>
    %7 = arith.addf %3, %6 : vector<2x32xf32>
    %c0_6 = arith.constant 0 : index
    %c0_7 = arith.constant 0 : index
    %8 = vector.load %arg6[%c0_6, %c0_7] : memref<2x32xf32, #tpu.memory_space<vmem>>, vector<2x32xf32>
    tpu.vector_store %arg6[%c0_6, %c0_7], %7 {strides = array<i32>} : memref<2x32xf32, #tpu.memory_space<vmem>>, vector<2x32xf32>,
    %c1_i32 = arith.constant 1 : i32
    %9 = arith.cmpi eq, %arg1, %c1_i32 : i32
    %10 = arith.extui %9 : i1 to i32
    %c0_i32_8 = arith.constant 0 : i32
    %11 = arith.cmpi ne, %10, %c0_i32_8 : i32
    scf.if %11 {
      %c0_9 = arith.constant 0 : index
      %c0_10 = arith.constant 0 : index
      %12 = vector.load %arg6[%c0_9, %c0_10] : memref<2x32xf32, #tpu.memory_space<vmem>>, vector<2x32xf32>
      %c0_11 = arith.constant 0 : index
      %c0_12 = arith.constant 0 : index
      %13 = vector.load %arg4[%c0_11, %c0_12] : memref<1x32xf32, #tpu.memory_space<vmem>>, vector<1x32xf32>
      %14 = vector.broadcast %13 : vector<1x32xf32> to vector<2x32xf32>
      %15 = arith.addf %12, %14 : vector<2x32xf32>
      %cst_13 = arith.constant 0.000000e+00 : f32
      %16 = vector.broadcast %cst_13 : f32 to vector<2x32xf32>
      %17 = arith.maximumf %15, %16 : vector<2x32xf32>
      %c0_14 = arith.constant 0 : index
      %c0_15 = arith.constant 0 : index
      %18 = vector.load %arg5[%c0_14, %c0_15] : memref<2x32xf32, #tpu.memory_space<vmem>>, vector<2x32xf32>
      tpu.vector_store %arg5[%c0_14, %c0_15], %17 {strides = array<i32>} : memref<2x32xf32, #tpu.memory_space<vmem>>, vector<2x32xf32>,
    } else {
    }
    return
  }
  func.func @transform_0(%arg0: i32, %arg1: i32) -> (i32, i32) {
    %c0_i32 = arith.constant 0 : i32
    return %arg0, %arg1 : i32, i32
  }
  func.func @transform_1(%arg0: i32, %arg1: i32) -> (i32, i32) {
    %c0_i32 = arith.constant 0 : i32
    %c0_i32_0 = arith.constant 0 : i32
    return %arg1, %c0_i32 : i32, i32
  }
  func.func @transform_2(%arg0: i32, %arg1: i32) -> (i32, i32) {
    %c0_i32 = arith.constant 0 : i32
    %c0_i32_0 = arith.constant 0 : i32
    %c0_i32_1 = arith.constant 0 : i32
    return %c0_i32, %c0_i32_0 : i32, i32
  }
  func.func @transform_3(%arg0: i32, %arg1: i32) -> (i32, i32) {
    %c0_i32 = arith.constant 0 : i32
    %c0_i32_0 = arith.constant 0 : i32
    return %arg0, %c0_i32 : i32, i32
  }
}

</mosaic_0001>

<llo_original>
// kernel: tpu_custom_call.1
$region0: #{tpu_custom_call.1}
  #allocation0 [shape = 'u32[]', space=smem, size = 0x4, offset = 0x4, fixed_abs, tag = 'smem constant byte address 0x4 - core index']
  #allocation1 [shape = 'u32[144,128]{1,0:T(1,128)}', space=vmem, size = 0x12000, scoped, tag = 'internal scratch']
  #allocation2 [shape = 'f32[2,32]{1,0:T(2,128)}', space=vmem, size = 0x400, scoped, tag = 'scratch operand']
  %s0 = inlined_call_operand.vmem [shape: bf16[2,1024], index: 0, kind: input, shape index: {}]
  %s1 = inlined_call_operand.vmem [shape: bf16[1024,32], index: 1, kind: input, shape index: {}]
  %s2 = inlined_call_operand.vmem [shape: f32[1,32], index: 2, kind: input, shape index: {}]
  %s3 = inlined_call_operand.hbm [shape: f32[2,32], index: 3, kind: output, shape index: {}]
  %s4 = sld [smem:[#allocation0]]
  $region53: #{tpu_custom_call.1} parent=0
    _
  %s6 = ssub.s32 1, %s4
  %s7 = scalar_select 0, %s6, %s4
  $region1: #{tpu_custom_call.1} parent=0
    #allocation3 [shape = 'u8[1024]{0}', space=vmem, size = 0x400, scoped, tag = 'output window, operand 0, single buffered']
    #allocation4 [shape = 's32[2]{0}', space=sflag, size = 0x8, scoped, tag = 'scoped memory for tpu_custom_call.1']
    %8 = vsyncpa [#allocation4], 0
    loop: start=0, step=1, limit=4
    $region2: #{tpu_custom_call.1} parent=1 // loop_pre_header
      _
    $region3: #{tpu_custom_call.1} parent=1 // loop_header
      %s10 = sphi 0, %s14
      %p11 = scmp.ge.s32.totalorder %s10, 4
      %s17 = sphi 0, %s29
      %s18 = sphi 0, %s25
      %s19 = sphi 0, %s17
      %s20 = sphi 0, %s18
      %s21 = sphi 0, %s19
      %s22 = sphi 0, %s20
      %s34 = sphi 0, %s36
      %s37 = sphi 0, %s34
      %s38 = sphi 0, %s37
      %s54 = sphi 0, %s38
      %s60 = sphi 0, %s62
      %s63 = sphi 0, %s60
      %s64 = sphi 0, %s63
      %s80 = sphi 0, %s64
      %s84 = sphi 0, %s84
      %s86 = sphi 0, %s84
      %s87 = sphi 0, %s86
      %s101 = sphi 0, %s87
      %s107 = sphi 0, %s109
      %s110 = sphi 0, %s107
      %s111 = sphi 0, %s110
      %s127 = sphi 0, %s111
    $region4: #{tpu_custom_call.1} parent=1 // loop_header_branch
      %13 = sbr.rel (%p11) target = $region8
    $region5: #{tpu_custom_call.1} parent=1 // loop_body
      %s15 = ssub.s32 %s10, 1
      %s16 = ssub.s32 %s10, 2
      %s23 = sadd.s32 1, %s18
      %p24 = scmp.ge.s32.totalorder %s23, 2
      %s25 = scalar_select %p24, 0, %s23
      %s26 = sadd.s32 1, %s17
      %s27 = scalar_select %p24, %s26, %s17
      %p28 = scmp.ge.s32.totalorder %s27, 1
      %s29 = scalar_select %p28, 0, %s27
      %s30 = ssub.s32 %s17, %s29
      %s31 = ssub.s32 %s18, %s25
      %s32 = sor.u32 %s30, %s31
      %p33 = scmp.eq.s32.totalorder %s32, 0
      %s35 = sadd.s32 %s34, 1
      %s36 = scalar_select %p33, %s34, %s35
      %p39 = pneg %p33
      %p40 = scmp.eq.s32.totalorder %s10, 1
      %p41 = por %p39, %p40
      %p42 = scmp.ne.s32.totalorder %s34, %s37
      %p43 = scmp.eq.s32.totalorder %s10, 0
      %p44 = por %p42, %p43
      %p45 = scmp.ne.s32.totalorder %s34, %s37
      %p46 = scmp.eq.s32.totalorder %s15, 1
      %p47 = por %p45, %p46
      %p48 = scmp.ne.s32.totalorder %s37, %s38
      %p49 = scmp.eq.s32.totalorder %s15, 0
      %p50 = por %p48, %p49
      %p51 = scmp.ne.s32.totalorder %s37, %s38
      %p52 = scmp.eq.s32.totalorder %s16, 1
      %p53 = por %p51, %p52
      %p55 = scmp.ne.s32.totalorder %s38, %s54
      %p56 = scmp.eq.s32.totalorder %s16, 0
      %p57 = por %p55, %p56
      %s58 = ssub.s32 %s18, %s25
      %p59 = scmp.eq.s32.totalorder %s58, 0
      %s61 = sadd.s32 %s60, 1
      %s62 = scalar_select %p59, %s60, %s61
      %p65 = pneg %p59
      %p66 = scmp.eq.s32.totalorder %s10, 1
      %p67 = por %p65, %p66
      %p68 = scmp.ne.s32.totalorder %s60, %s63
      %p69 = scmp.eq.s32.totalorder %s10, 0
      %p70 = por %p68, %p69
      %p71 = scmp.ne.s32.totalorder %s60, %s63
      %p72 = scmp.eq.s32.totalorder %s15, 1
      %p73 = por %p71, %p72
      %p74 = scmp.ne.s32.totalorder %s63, %s64
      %p75 = scmp.eq.s32.totalorder %s15, 0
      %p76 = por %p74, %p75
      %p77 = scmp.ne.s32.totalorder %s63, %s64
      %p78 = scmp.eq.s32.totalorder %s16, 1
      %p79 = por %p77, %p78
      %p81 = scmp.ne.s32.totalorder %s64, %s80
      %p82 = scmp.eq.s32.totalorder %s16, 0
      %p83 = por %p81, %p82
      %s85 = sadd.s32 %s84, 1
      %p88 = scmp.eq.s32.totalorder %s10, 1
      %p89 = scmp.ne.s32.totalorder %s84, %s86
      %p90 = scmp.eq.s32.totalorder %s10, 0
      %p91 = por %p89, %p90
      %p92 = scmp.ne.s32.totalorder %s84, %s86
      %p93 = scmp.eq.s32.totalorder %s15, 1
      %p94 = por %p92, %p93
      %p95 = scmp.ne.s32.totalorder %s86, %s87
      %p96 = scmp.eq.s32.totalorder %s15, 0
      %p97 = por %p95, %p96
      %p98 = scmp.ne.s32.totalorder %s86, %s87
      %p99 = scmp.eq.s32.totalorder %s16, 1
      %p100 = por %p98, %p99
      %p102 = scmp.ne.s32.totalorder %s87, %s101
      %p103 = scmp.eq.s32.totalorder %s16, 0
      %p104 = por %p102, %p103
      %s105 = ssub.s32 %s17, %s29
      %p106 = scmp.eq.s32.totalorder %s105, 0
      %s108 = sadd.s32 %s107, 1
      %s109 = scalar_select %p106, %s107, %s108
      %p112 = pneg %p106
      %p113 = scmp.eq.s32.totalorder %s10, 1
      %p114 = por %p112, %p113
      %p115 = scmp.ne.s32.totalorder %s107, %s110
      %p116 = scmp.eq.s32.totalorder %s10, 0
      %p117 = por %p115, %p116
      %p118 = scmp.ne.s32.totalorder %s107, %s110
      %p119 = scmp.eq.s32.totalorder %s15, 1
      %p120 = por %p118, %p119
      %p121 = scmp.ne.s32.totalorder %s110, %s111
      %p122 = scmp.eq.s32.totalorder %s15, 0
      %p123 = por %p121, %p122
      %p124 = scmp.ne.s32.totalorder %s110, %s111
      %p125 = scmp.eq.s32.totalorder %s16, 1
      %p126 = por %p124, %p125
      %p128 = scmp.ne.s32.totalorder %s111, %s127
      %p129 = scmp.eq.s32.totalorder %s16, 0
      %p130 = por %p128, %p129
      %p131 = scmp.le.s32.totalorder 1, %s10
      %p132 = scmp.lt.s32.totalorder %s10, 3
      %p133 = pnand %p131, %p132
      %p134 = pneg %p133
      // Predicated region
      $region9: #{tpu_custom_call.1} parent=5 // pred_check
        _
      $region10: #{tpu_custom_call.1} parent=5 // pred_check_branch
        %136 = sbr.rel (%p133) target = $region12
      $region11: #{tpu_custom_call.1} parent=5 // pred_region
        %s137 = ssub.s32 %s10, 1
        // Predicated region
        $region13: #{tpu_custom_call.1} parent=11 // pred_check
          %p138 = pneg %p97
        $region14: #{tpu_custom_call.1} parent=11 // pred_check_branch
          %140 = sbr.rel (%p138) target = $region16
        $region15: #{tpu_custom_call.1} parent=11 // pred_region
          _
        $region16: #{tpu_custom_call.1} parent=11 // pred_fallthru
          _
      $region12: #{tpu_custom_call.1} parent=5 // pred_fallthru
        _
      %p141 = scmp.lt.s32.totalorder %s10, 2
      // Predicated region
      $region17: #{tpu_custom_call.1} parent=5 // pred_check
        %p142 = pneg %p141
      $region18: #{tpu_custom_call.1} parent=5 // pred_check_branch
        %144 = sbr.rel (%p142) target = $region20
      $region19: #{tpu_custom_call.1} parent=5 // pred_region
        // Predicated region
        $region21: #{tpu_custom_call.1} parent=19 // pred_check
          %p145 = pneg %p44
        $region22: #{tpu_custom_call.1} parent=19 // pred_check_branch
          %147 = sbr.rel (%p145) target = $region24
        $region23: #{tpu_custom_call.1} parent=19 // pred_region
          %s148 = smul.u32 4, %s18
          %p149 = scmp.lt.s32.totalorder %s17, 0
          %s150 = scalar_select %p149, %s17, 0
          %p151 = scmp.lt.s32.totalorder %s148, 7
          %s152 = scalar_select %p151, %s148, 7
          %s153 = smul.addr %s150, 8
          %s154 = sadd.s32 %s152, %s153
          %s155 = scalar_lea.vmem %s0, %s154
          %s156 = smul.u32 4, %s18
        $region24: #{tpu_custom_call.1} parent=19 // pred_fallthru
          _
        // Predicated region
        $region25: #{tpu_custom_call.1} parent=19 // pred_check
          %p157 = pneg %p70
        $region26: #{tpu_custom_call.1} parent=19 // pred_check_branch
          %159 = sbr.rel (%p157) target = $region28
        $region27: #{tpu_custom_call.1} parent=19 // pred_region
          %s160 = smul.u32 64, %s18
          %p161 = scmp.lt.s32.totalorder %s160, 127
          %s162 = scalar_select %p161, %s160, 127
          %s163 = smul.addr %s162, 4
          %s164 = scalar_lea.vmem %s1, %s163
          %s165 = smul.u32 64, %s18
        $region28: #{tpu_custom_call.1} parent=19 // pred_fallthru
          _
      $region20: #{tpu_custom_call.1} parent=5 // pred_fallthru
        _
      %p166 = scmp.le.s32.totalorder 1, %s10
      %p167 = scmp.lt.s32.totalorder %s10, 3
      %p168 = pnand %p166, %p167
      %p169 = pneg %p168
      // Predicated region
      $region29: #{tpu_custom_call.1} parent=5 // pred_check
        _
      $region30: #{tpu_custom_call.1} parent=5 // pred_check_branch
        %171 = sbr.rel (%p168) target = $region32
      $region31: #{tpu_custom_call.1} parent=5 // pred_region
        %s172 = ssub.s32 %s10, 1
        %s173 = smul.u32 4, %s20
        %p174 = scmp.lt.s32.totalorder %s19, 0
        %s175 = scalar_select %p174, %s19, 0
        %p176 = scmp.lt.s32.totalorder %s173, 7
        %s177 = scalar_select %p176, %s173, 7
        %s178 = smul.addr %s175, 8
        %s179 = sadd.s32 %s177, %s178
        %s180 = scalar_lea.vmem %s0, %s179
        %p181 = pneg %p50
        %p182 = pneg %p47
        %s183 = smul.u32 64, %s20
        %p184 = scmp.lt.s32.totalorder %s183, 127
        %s185 = scalar_select %p184, %s183, 127
        %s186 = smul.addr %s185, 4
        %s187 = scalar_lea.vmem %s1, %s186
        %p188 = pneg %p76
        %p189 = pneg %p73
        %p190 = pneg %p97
        %p191 = pneg %p94
        %p192 = pneg %p123
        %p193 = pneg %p120
        %s194 = smul.u32 4, %s20
        %p195 = scmp.lt.s32.totalorder %s19, 0
        %s196 = scalar_select %p195, %s19, 0
        %p197 = scmp.lt.s32.totalorder %s194, 7
        %s198 = scalar_select %p197, %s194, 7
        %s199 = smul.addr %s196, 8
        %s200 = sadd.s32 %s198, %s199
        %s201 = scalar_lea.vmem %s0, %s200
        %s202 = smul.u32 4, %s20
        %s203 = smul.u32 64, %s20
        %p204 = scmp.lt.s32.totalorder %s203, 127
        %s205 = scalar_select %p204, %s203, 127
        %s206 = smul.addr %s205, 4
        %s207 = scalar_lea.vmem %s1, %s206
        %s208 = smul.u32 64, %s20
        %p210 = scmp.eq.s32.totalorder %s20, 0
        // Predicated region
        $region33: #{tpu_custom_call.1} parent=31 // pred_check
          %p211 = pneg %p210
        $region34: #{tpu_custom_call.1} parent=31 // pred_check_branch
          %213 = sbr.rel (%p211) target = $region36
        $region35: #{tpu_custom_call.1} parent=31 // pred_region
          %vm214 = vcmask 254976
          %215 = vst.msk [vmem:[#allocation2] sm:$0x3] %vm214, 0.0
        $region36: #{tpu_custom_call.1} parent=31 // pred_fallthru
          _
        %v216 = vld [vmem:[#allocation2] sm:$0x3]
        %v217 = vld [vmem:[%s201] sm:$0xf]
        %v218 = vld [vmem:[%s207] sm:$0xf]
        %v219 = vld [vmem:[%s207 + $0x4] sm:$0xf]
        %v220 = vld [vmem:[%s207 + $0x8] sm:$0xf]
        %v221 = vld [vmem:[%s207 + $0xc] sm:$0xf]
        %v222 = vld [vmem:[%s207 + $0x10] sm:$0xf]
        %v223 = vld [vmem:[%s207 + $0x14] sm:$0xf]
        %v224 = vld [vmem:[%s207 + $0x18] sm:$0xf]
        %v225 = vld [vmem:[%s207 + $0x1c] sm:$0xf]
        %v226 = vld [vmem:[%s207 + $0x20] sm:$0xf]
        %v227 = vld [vmem:[%s207 + $0x24] sm:$0xf]
        %v228 = vld [vmem:[%s207 + $0x28] sm:$0xf]
        %v229 = vld [vmem:[%s207 + $0x2c] sm:$0xf]
        %v230 = vld [vmem:[%s207 + $0x30] sm:$0xf]
        %v231 = vld [vmem:[%s207 + $0x34] sm:$0xf]
        %v232 = vld [vmem:[%s207 + $0x38] sm:$0xf]
        %v233 = vld [vmem:[%s207 + $0x3c] sm:$0xf]
        %v234 = vld [vmem:[%s207 + $0x40] sm:$0xf]
        %v235 = vld [vmem:[%s207 + $0x44] sm:$0xf]
        %v236 = vld [vmem:[%s207 + $0x48] sm:$0xf]
        %v237 = vld [vmem:[%s207 + $0x4c] sm:$0xf]
        %v238 = vld [vmem:[%s207 + $0x50] sm:$0xf]
        %v239 = vld [vmem:[%s207 + $0x54] sm:$0xf]
        %v240 = vld [vmem:[%s207 + $0x58] sm:$0xf]
        %v241 = vld [vmem:[%s207 + $0x5c] sm:$0xf]
        %v242 = vld [vmem:[%s207 + $0x60] sm:$0xf]
        %v243 = vld [vmem:[%s207 + $0x64] sm:$0xf]
        %v244 = vld [vmem:[%s207 + $0x68] sm:$0xf]
        %v245 = vld [vmem:[%s207 + $0x6c] sm:$0xf]
        %v246 = vld [vmem:[%s207 + $0x70] sm:$0xf]
        %v247 = vld [vmem:[%s207 + $0x74] sm:$0xf]
        %v248 = vld [vmem:[%s207 + $0x78] sm:$0xf]
        %v249 = vld [vmem:[%s207 + $0x7c] sm:$0xf]
        %v250 = vld [vmem:[%s207 + $0x80] sm:$0xf]
        %v251 = vld [vmem:[%s207 + $0x84] sm:$0xf]
        %v252 = vld [vmem:[%s207 + $0x88] sm:$0xf]
        %v253 = vld [vmem:[%s207 + $0x8c] sm:$0xf]
        %v254 = vld [vmem:[%s207 + $0x90] sm:$0xf]
        %v255 = vld [vmem:[%s207 + $0x94] sm:$0xf]
        %v256 = vld [vmem:[%s207 + $0x98] sm:$0xf]
        %v257 = vld [vmem:[%s207 + $0x9c] sm:$0xf]
        %v258 = vld [vmem:[%s207 + $0xa0] sm:$0xf]
        %v259 = vld [vmem:[%s207 + $0xa4] sm:$0xf]
        %v260 = vld [vmem:[%s207 + $0xa8] sm:$0xf]
        %v261 = vld [vmem:[%s207 + $0xac] sm:$0xf]
        %v262 = vld [vmem:[%s207 + $0xb0] sm:$0xf]
        %v263 = vld [vmem:[%s207 + $0xb4] sm:$0xf]
        %v264 = vld [vmem:[%s207 + $0xb8] sm:$0xf]
        %v265 = vld [vmem:[%s207 + $0xbc] sm:$0xf]
        %v266 = vld [vmem:[%s207 + $0xc0] sm:$0xf]
        %v267 = vld [vmem:[%s207 + $0xc4] sm:$0xf]
        %v268 = vld [vmem:[%s207 + $0xc8] sm:$0xf]
        %v269 = vld [vmem:[%s207 + $0xcc] sm:$0xf]
        %v270 = vld [vmem:[%s207 + $0xd0] sm:$0xf]
        %v271 = vld [vmem:[%s207 + $0xd4] sm:$0xf]
        %v272 = vld [vmem:[%s207 + $0xd8] sm:$0xf]
        %v273 = vld [vmem:[%s207 + $0xdc] sm:$0xf]
        %v274 = vld [vmem:[%s207 + $0xe0] sm:$0xf]
        %v275 = vld [vmem:[%s207 + $0xe4] sm:$0xf]
        %v276 = vld [vmem:[%s207 + $0xe8] sm:$0xf]
        %v277 = vld [vmem:[%s207 + $0xec] sm:$0xf]
        %v278 = vld [vmem:[%s207 + $0xf0] sm:$0xf]
        %v279 = vld [vmem:[%s207 + $0xf4] sm:$0xf]
        %v280 = vld [vmem:[%s207 + $0xf8] sm:$0xf]
        %v281 = vld [vmem:[%s207 + $0xfc] sm:$0xf]
        %v284 = vunpack.c.l.s4 1966171168
        %v285 = vunpack.c.0.s8 %v284
        %v286 = vlaneseq
        %v287 = vshrl.u32 %v286, 7
        %v288 = vsub.s32 %v285, %v287
        %v289 = vrot.slane %v217, %v288
        %v290 = vcombine.high %v289, %v289
        %v292 = vunpack.c.l.s4 1966171168
        %v293 = vunpack.c.0.s8 %v292
        %v294 = vlaneseq
        %v295 = vshrl.u32 %v294, 7
        %v296 = vsub.s32 %v293, %v295
        %v297 = vrot.slane %v289, %v296
        %v299 = vunpack.c.l.s4 1966171168
        %v300 = vunpack.c.0.s8 %v299
        %v301 = vlaneseq
        %v302 = vshrl.u32 %v301, 7
        %v303 = vsub.s32 %v300, %v302
        %v304 = vrot.slane %v290, %v303
        %v305 = vcombine.high %v297, %v297
        %v306 = vcombine.high %v304, %v304
        %v375 = vunpack.c.l.b16 %v218
        %v376 = vunpack.c.l.b16 %v219
        %v377 = vunpack.c.l.b16 %v220
        %v378 = vunpack.c.l.b16 %v221
        %v379 = vunpack.c.l.b16 %v222
        %v380 = vunpack.c.l.b16 %v223
        %v381 = vunpack.c.l.b16 %v224
        %v382 = vunpack.c.l.b16 %v225
        %v383 = vunpack.c.l.b16 %v226
        %v384 = vunpack.c.l.b16 %v227
        %v385 = vunpack.c.l.b16 %v228
        %v386 = vunpack.c.l.b16 %v229
        %v387 = vunpack.c.l.b16 %v230
        %v388 = vunpack.c.l.b16 %v231
        %v389 = vunpack.c.l.b16 %v232
        %v390 = vunpack.c.l.b16 %v233
        %v391 = vunpack.c.l.b16 %v234
        %v392 = vunpack.c.l.b16 %v235
        %v393 = vunpack.c.l.b16 %v236
        %v394 = vunpack.c.l.b16 %v237
        %v395 = vunpack.c.l.b16 %v238
        %v396 = vunpack.c.l.b16 %v239
        %v397 = vunpack.c.l.b16 %v240
        %v398 = vunpack.c.l.b16 %v241
        %v399 = vunpack.c.l.b16 %v242
        %v400 = vunpack.c.l.b16 %v243
        %v401 = vunpack.c.l.b16 %v244
        %v402 = vunpack.c.l.b16 %v245
        %v403 = vunpack.c.l.b16 %v246
        %v404 = vunpack.c.l.b16 %v247
        %v405 = vunpack.c.l.b16 %v248
        %v406 = vunpack.c.l.b16 %v249
        %v407 = vunpack.c.l.b16 %v250
        %v408 = vunpack.c.l.b16 %v251
        %v409 = vunpack.c.l.b16 %v252
        %v410 = vunpack.c.l.b16 %v253
        %v411 = vunpack.c.l.b16 %v254
        %v412 = vunpack.c.l.b16 %v255
        %v413 = vunpack.c.l.b16 %v256
        %v414 = vunpack.c.l.b16 %v257
        %v415 = vunpack.c.l.b16 %v258
        %v416 = vunpack.c.l.b16 %v259
        %v417 = vunpack.c.l.b16 %v260
        %v418 = vunpack.c.l.b16 %v261
        %v419 = vunpack.c.l.b16 %v262
        %v420 = vunpack.c.l.b16 %v263
        %v421 = vunpack.c.l.b16 %v264
        %v422 = vunpack.c.l.b16 %v265
        %v423 = vunpack.c.l.b16 %v266
        %v424 = vunpack.c.l.b16 %v267
        %v425 = vunpack.c.l.b16 %v268
        %v426 = vunpack.c.l.b16 %v269
        %v427 = vunpack.c.l.b16 %v270
        %v428 = vunpack.c.l.b16 %v271
        %v429 = vunpack.c.l.b16 %v272
        %v430 = vunpack.c.l.b16 %v273
        %v431 = vunpack.c.l.b16 %v274
        %v432 = vunpack.c.l.b16 %v275
        %v433 = vunpack.c.l.b16 %v276
        %v434 = vunpack.c.l.b16 %v277
        %v435 = vunpack.c.l.b16 %v278
        %v436 = vunpack.c.l.b16 %v279
        %v437 = vunpack.c.l.b16 %v280
        %v438 = vunpack.c.l.b16 %v281
        %v439 = vpack.c.b16 %v376, %v375
        %v440 = vpack.c.b16 %v378, %v377
        %v441 = vpack.c.b16 %v380, %v379
        %v442 = vpack.c.b16 %v382, %v381
        %v443 = vpack.c.b16 %v384, %v383
        %v444 = vpack.c.b16 %v386, %v385
        %v445 = vpack.c.b16 %v388, %v387
        %v446 = vpack.c.b16 %v390, %v389
        %v447 = vpack.c.b16 %v392, %v391
        %v448 = vpack.c.b16 %v394, %v393
        %v449 = vpack.c.b16 %v396, %v395
        %v450 = vpack.c.b16 %v398, %v397
        %v451 = vpack.c.b16 %v400, %v399
        %v452 = vpack.c.b16 %v402, %v401
        %v453 = vpack.c.b16 %v404, %v403
        %v454 = vpack.c.b16 %v406, %v405
        %v455 = vpack.c.b16 %v408, %v407
        %v456 = vpack.c.b16 %v410, %v409
        %v457 = vpack.c.b16 %v412, %v411
        %v458 = vpack.c.b16 %v414, %v413
        %v459 = vpack.c.b16 %v416, %v415
        %v460 = vpack.c.b16 %v418, %v417
        %v461 = vpack.c.b16 %v420, %v419
        %v462 = vpack.c.b16 %v422, %v421
        %v463 = vpack.c.b16 %v424, %v423
        %v464 = vpack.c.b16 %v426, %v425
        %v465 = vpack.c.b16 %v428, %v427
        %v466 = vpack.c.b16 %v430, %v429
        %v467 = vpack.c.b16 %v432, %v431
        %v468 = vpack.c.b16 %v434, %v433
        %v469 = vpack.c.b16 %v436, %v435
        %v470 = vpack.c.b16 %v438, %v437
        %503 = vmatprep.subr.bf16.mxu0 0
        %504 = vmatpush1.bf16.msra.mxu0 %v439
        %505 = vmatprep.subr.bf16.mxu0 0
        %506 = vmatpush1.bf16.msra.mxu0 %v440
        %507 = vmatprep.subr.bf16.mxu0 0
        %508 = vmatpush1.bf16.msra.mxu0 %v441
        %509 = vmatprep.subr.bf16.mxu0 0
        %510 = vmatpush1.bf16.msra.mxu0 %v442
        %511 = vmatprep.subr.bf16.mxu0 0
        %512 = vmatpush1.bf16.msra.mxu0 %v443
        %513 = vmatprep.subr.bf16.mxu0 0
        %514 = vmatpush1.bf16.msra.mxu0 %v444
        %515 = vmatprep.subr.bf16.mxu0 0
        %516 = vmatpush1.bf16.msra.mxu0 %v445
        %517 = vmatprep.subr.bf16.mxu0 0
        %518 = vmatpush1.bf16.msra.mxu0 %v446
        %519 = vmatprep.subr.bf16.mxu0 0
        %520 = vmatpush1.bf16.msra.mxu0 %v447
        %521 = vmatprep.subr.bf16.mxu0 0
        %522 = vmatpush1.bf16.msra.mxu0 %v448
        %523 = vmatprep.subr.bf16.mxu0 0
        %524 = vmatpush1.bf16.msra.mxu0 %v449
        %525 = vmatprep.subr.bf16.mxu0 0
        %526 = vmatpush1.bf16.msra.mxu0 %v450
        %527 = vmatprep.subr.bf16.mxu0 0
        %528 = vmatpush1.bf16.msra.mxu0 %v451
        %529 = vmatprep.subr.bf16.mxu0 0
        %530 = vmatpush1.bf16.msra.mxu0 %v452
        %531 = vmatprep.subr.bf16.mxu0 0
        %532 = vmatpush1.bf16.msra.mxu0 %v453
        %533 = vmatprep.subr.bf16.mxu0 0
        %534 = vmatpush1.bf16.msra.mxu0 %v454
        %535 = vmatprep.mubr.bf16.mxu0 %v304
        %536 = vmatmul.mubr.bf16.gmra.mrb[0].mxu0 %v297
        %v537 = vpop.f32.mrb[0].mxu0
        %v538 = vadd.f32 0.0, %v537
        %v539 = vpop.f32.mrb[0].mxu0
        %v540 = vpop.f32.mrb[0].mxu0
        %v541 = vpop.f32.mrb[0].mxu0
        %542 = vdwg.mxu0
        %543 = vmatprep.subr.bf16.mxu0 0
        %544 = vmatpush1.bf16.msra.mxu0 %v455
        %545 = vmatprep.subr.bf16.mxu0 0
        %546 = vmatpush1.bf16.msra.mxu0 %v456
        %547 = vmatprep.subr.bf16.mxu0 0
        %548 = vmatpush1.bf16.msra.mxu0 %v457
        %549 = vmatprep.subr.bf16.mxu0 0
        %550 = vmatpush1.bf16.msra.mxu0 %v458
        %551 = vmatprep.subr.bf16.mxu0 0
        %552 = vmatpush1.bf16.msra.mxu0 %v459
        %553 = vmatprep.subr.bf16.mxu0 0
        %554 = vmatpush1.bf16.msra.mxu0 %v460
        %555 = vmatprep.subr.bf16.mxu0 0
        %556 = vmatpush1.bf16.msra.mxu0 %v461
        %557 = vmatprep.subr.bf16.mxu0 0
        %558 = vmatpush1.bf16.msra.mxu0 %v462
        %559 = vmatprep.subr.bf16.mxu0 0
        %560 = vmatpush1.bf16.msra.mxu0 %v463
        %561 = vmatprep.subr.bf16.mxu0 0
        %562 = vmatpush1.bf16.msra.mxu0 %v464
        %563 = vmatprep.subr.bf16.mxu0 0
        %564 = vmatpush1.bf16.msra.mxu0 %v465
        %565 = vmatprep.subr.bf16.mxu0 0
        %566 = vmatpush1.bf16.msra.mxu0 %v466
        %567 = vmatprep.subr.bf16.mxu0 0
        %568 = vmatpush1.bf16.msra.mxu0 %v467
        %569 = vmatprep.subr.bf16.mxu0 0
        %570 = vmatpush1.bf16.msra.mxu0 %v468
        %571 = vmatprep.subr.bf16.mxu0 0
        %572 = vmatpush1.bf16.msra.mxu0 %v469
        %573 = vmatprep.subr.bf16.mxu0 0
        %574 = vmatpush1.bf16.msra.mxu0 %v470
        %575 = vmatprep.mubr.bf16.mxu0 %v306
        %576 = vmatmul.mubr.bf16.gmra.mrb[0].mxu0 %v305
        %v577 = vpop.f32.mrb[0].mxu0
        %v578 = vadd.f32 %v538, %v577
        %v579 = vpop.f32.mrb[0].mxu0
        %v580 = vpop.f32.mrb[0].mxu0
        %v581 = vpop.f32.mrb[0].mxu0
        %582 = vdwg.mxu0
        %v583 = vadd.f32 %v216, %v578
        %vm584 = vcmask 254976
        %585 = vst.msk [vmem:[#allocation2] sm:$0x3] %vm584, %v583
        %p586 = scmp.eq.s32.totalorder %s20, 1
        // Predicated region
        $region37: #{tpu_custom_call.1} parent=31 // pred_check
          %p587 = pneg %p586
        $region38: #{tpu_custom_call.1} parent=31 // pred_check_branch
          %589 = sbr.rel (%p587) target = $region40
        $region39: #{tpu_custom_call.1} parent=31 // pred_region
          %v590 = vld [vmem:[#allocation2] sm:$0x3]
          %v591 = vld [vmem:[%s2] sm:$0x1]
          %v593 = vlaneseq
          %v594 = vshrl.u32 %v593, 7
          %v595 = vsub.s32 0, %v594
          %v596 = vrot.slane %v591, %v595
          %v598 = vadd.f32 %v590, %v596
          %v599 = vmax.f32 %v598, 0.0
          %600 = vst.msk [vmem:[#allocation3] sm:$0x3] %vm584, %v599
        $region40: #{tpu_custom_call.1} parent=31 // pred_fallthru
          _
        // Predicated region
        $region41: #{tpu_custom_call.1} parent=31 // pred_check
          %p601 = pneg %p120
        $region42: #{tpu_custom_call.1} parent=31 // pred_check_branch
          %603 = sbr.rel (%p601) target = $region44
        $region43: #{tpu_custom_call.1} parent=31 // pred_region
          %s605 = ssub.s32 32, 32
          %606 = vsyncadd [#allocation4], %s605
          %s607 = smul.addr %s19, 32
          %s608 = scalar_lea.hbm %s3, %s607
          %s610 = sshll.u32 [#allocation3], 4
          %s611 = int_to_ptr.vmem [resolvable:$true] %s610
          %613 = dma.vmem_to_hbm [thread:$0]  %s611, 32, %s608, [#allocation4]
        $region44: #{tpu_custom_call.1} parent=31 // pred_fallthru
          _
        // Predicated region
        $region45: #{tpu_custom_call.1} parent=31 // pred_check
          %p614 = pneg %p120
        $region46: #{tpu_custom_call.1} parent=31 // pred_check_branch
          %616 = sbr.rel (%p614) target = $region48
        $region47: #{tpu_custom_call.1} parent=31 // pred_region
          %617 = dma.done [#allocation4], 32
        $region48: #{tpu_custom_call.1} parent=31 // pred_fallthru
          _
      $region32: #{tpu_custom_call.1} parent=5 // pred_fallthru
        _
      %p618 = scmp.le.s32.totalorder 2, %s10
      // Predicated region
      $region49: #{tpu_custom_call.1} parent=5 // pred_check
        %p619 = pneg %p618
      $region50: #{tpu_custom_call.1} parent=5 // pred_check_branch
        %621 = sbr.rel (%p619) target = $region52
      $region51: #{tpu_custom_call.1} parent=5 // pred_region
        %s622 = ssub.s32 %s10, 2
      $region52: #{tpu_custom_call.1} parent=5 // pred_fallthru
        _
    $region6: #{tpu_custom_call.1} parent=1 // loop_footer
      %s14 = sadd.s32 1, %s10
    $region7: #{tpu_custom_call.1} parent=1 // loop_footer_branch
      %9 = sbr.rel target = $region3
    $region8: #{tpu_custom_call.1} parent=1 // loop_exit
      _
    %623 = vsyncpa [#allocation4], 1
    %s624 = scalar_lea.sflag [#allocation4], 1
    %625 = vsyncpa %s624, 1

</llo_original>
